<compile_context>
chip_gen: v7x
topology: tpu7x:2x2x1
jax: 0.10.0
libtpu: 0.0.40
codegen_flags: <defaults>
</compile_context>

<pallas_src>
import numpy as np
import jax
import jax.numpy as jnp
from jax.experimental import pallas as pl
from jax.experimental.pallas import tpu as pltpu

BN_EPS = 1e-5
PROJ_PAD = 128          # lane-dense width for the EdgePooling score projection
_MIB = 1024 * 1024


def _round_up(x, m):
    return ((x + m - 1) // m) * m


def _vmem_capacity_bytes():
    try:
        return int(pltpu.get_tpu_info().vmem_capacity_bytes)
    except Exception:
        return 128 * _MIB


def _vmem_limit_bytes():
    # v5e/v6e have 128 MiB physical VMEM (16/32 MiB default scoped limit) ->
    # raise toward 100 MiB; v7x has 64 MiB physical -> stay under ~48 MiB.
    return 100 * _MIB if _vmem_capacity_bytes() >= 128 * _MIB else 48 * _MIB


def _pad_nodes(n):
    # multiple of 16 (bf16 sublane packing) for tiny graphs, multiple of 128
    # (lane width / MXU-friendly k tiles) once the graph needs row tiling.
    return _round_up(n, 16) if n <= 128 else _round_up(n, 128)


def _pick_tiles(n_pad):
    # Largest 128-aligned tile that divides n_pad, capped per generation
    # (v7x: 64 MiB VMEM -> roughly half the v6e tile).  Toy graphs fall back
    # to the whole padded array as a single block (grid == (1, 1)).
    max_tile = 512 if _vmem_capacity_bytes() >= 128 * _MIB else 256
    if n_pad <= max_tile:
        return n_pad, n_pad
    for t in (max_tile, 256, 128):
        if n_pad % t == 0:
            return t, t
    return n_pad, n_pad


# ------------------------------ Pallas kernels -------------------------------

def make_gin_layer_kernel(with_proj):
    """One GIN layer (eval mode), row-tiled; the final reduction step also
    runs the layer MLP and (optionally) the fused EdgePooling projection."""

    def kernel(*refs):
        if with_proj:
            (adj_ref, h_ref, w1_ref, t1_ref, w2_ref, t2_ref, we_ref,
             h_out_ref, proj_ref, acc_ref) = refs
        else:
            (adj_ref, h_ref, w1_ref, t1_ref, w2_ref, t2_ref,
             h_out_ref, acc_ref) = refs

        k = pl.program_id(1)

        @pl.when(k == 0)
        def _init():
            acc_ref[...] = jnp.zeros_like(acc_ref)

        # GIN aggregation; the (1+eps) self term is folded into the adjacency
        # diagonal, so this is a single MXU matmul per (row, k) tile.
        acc_ref[...] += jnp.dot(adj_ref[...], h_ref[...],
                                preferred_element_type=jnp.float32)

        @pl.when(k == pl.num_programs(1) - 1)
        def _finalize():
            # mlp: Linear -> BN(eval, folded into W/t) -> ReLU -> Linear, then
            # the outer BatchNorm (folded) + ReLU.  Dropout(eval) is identity.
            z = jnp.dot(acc_ref[...].astype(jnp.bfloat16), w1_ref[...],
                        preferred_element_type=jnp.float32)
            z = jnp.maximum(z + t1_ref[...], 0.0)
            z = jnp.dot(z.astype(jnp.bfloat16), w2_ref[...],
                        preferred_element_type=jnp.float32)
            z = jnp.maximum(z + t2_ref[...], 0.0)
            h_out = z.astype(jnp.bfloat16)
            h_out_ref[...] = h_out
            if with_proj:
                # EdgePooling Linear(2H, 1) split over [x_src || x_dst]:
                # col 0 = x . w_src, col 1 = x . w_dst, cols 2..127 zero pad.
                proj_ref[...] = jnp.dot(
                    h_out, we_ref[...],
                    preferred_element_type=jnp.float32).astype(jnp.bfloat16)

    return kernel


def run_gin_layer(adj, h, layer, we_pad=None):
    n, d_in = adj.shape[0], h.shape[1]
    two_h, hid = layer["w1"].shape[1], layer["w2"].shape[1]
    with_proj = we_pad is not None
    tm, tk = _pick_tiles(n)

    ins = [adj, h, layer["w1"], layer["t1"], layer["w2"], layer["t2"]]
    in_specs = [
        pl.BlockSpec((tm, tk), lambda i, k: (i, k)),       # adjacency stream
        pl.BlockSpec((tk, d_in), lambda i, k: (k, 0)),     # h reduction tile
        pl.BlockSpec((d_in, two_h), lambda i, k: (0, 0)),  # weights resident
        pl.BlockSpec((1, two_h), lambda i, k: (0, 0)),
        pl.BlockSpec((two_h, hid), lambda i, k: (0, 0)),
        pl.BlockSpec((1, hid), lambda i, k: (0, 0)),
    ]
    h_spec = pl.BlockSpec((tm, hid), lambda i, k: (i, 0))
    h_shape = jax.ShapeDtypeStruct((n, hid), jnp.bfloat16)
    if with_proj:
        ins.append(we_pad)
        in_specs.append(pl.BlockSpec((hid, PROJ_PAD), lambda i, k: (0, 0)))
        out_specs = (h_spec, pl.BlockSpec((tm, PROJ_PAD), lambda i, k: (i, 0)))
        out_shape = (h_shape, jax.ShapeDtypeStruct((n, PROJ_PAD), jnp.bfloat16))
    else:
        out_specs = h_spec
        out_shape = h_shape

    # advisory cost estimate for XLA scheduling around the custom call
    flops = 2 * n * n * d_in + 2 * n * d_in * two_h + 2 * n * two_h * hid
    nbytes = sum(int(a.size) * a.dtype.itemsize for a in ins) + n * hid * 2
    if with_proj:
        flops += 2 * n * hid * PROJ_PAD
        nbytes += n * PROJ_PAD * 2

    return pl.pallas_call(
        make_gin_layer_kernel(with_proj),
        grid_spec=pltpu.PrefetchScalarGridSpec(
            num_scalar_prefetch=0,
            grid=(n // tm, n // tk),
            in_specs=in_specs,
            out_specs=out_specs,
            scratch_shapes=[pltpu.VMEM((tm, d_in), jnp.float32)]),
        out_shape=out_shape,
        compiler_params=pltpu.CompilerParams(
            # row axis "parallel": shards the MXU-bound A@h loop across v7x's
            # two TensorCores; no-op on single-TC v5e/v6e.
            dimension_semantics=("parallel", "arbitrary"),
            vmem_limit_bytes=_vmem_limit_bytes()),
        cost_estimate=pl.CostEstimate(flops=int(flops), transcendentals=0,
                                      bytes_accessed=int(nbytes)),
    )(*ins)


# ------------------------------- glue / host ----------------------------------

def segment_softmax(raw, seg, num_segments):
    # torch_geometric softmax(e, edge_index[1], num_nodes).  Segments with no
    # incoming edges get -inf max / 0 denom but are never gathered through seg.
    m = jax.ops.segment_max(raw, seg, num_segments=num_segments)
    e = jnp.exp(raw - m[seg])
    denom = jax.ops.segment_sum(e, seg, num_segments=num_segments)
    return e / denom[seg]


def greedy_edge_merge(score, src, dst, num_nodes):
    # TODO(synk): EdgePooling._merge_edges is an inherently sequential,
    # data-dependent greedy matching; executed on host in numpy, not in Pallas.
    order = np.argsort(-score, kind="stable")   # deterministic tie-breaking
    remaining = np.ones(num_nodes, dtype=bool)
    cluster = np.full(num_nodes, -1, dtype=np.int64)
    cluster_scores = []
    cid = 0
    for e in order:
        s, t = int(src[e]), int(dst[e])
        if not (remaining[s] and remaining[t]):
            continue
        cluster[s] = cid
        remaining[s] = False
        if s != t:
            cluster[t] = cid
            remaining[t] = False
        cluster_scores.append(float(score[e]))
        cid += 1
    for nidx in np.nonzero(remaining)[0]:        # un-merged nodes keep score 1.0
        cluster[nidx] = cid
        cluster_scores.append(1.0)
        cid += 1
    return cluster, np.asarray(cluster_scores, dtype=np.float32)


def init_params(key, input_dim, hid_dim, output_dim, num_layers=2):
    params = {"gin_layers": []}
    d_in = input_dim
    keys = iter(jax.random.split(key, num_layers * 4 + 8))
    # Eval-mode BatchNorm with default running stats (mean=0, var=1, gamma=1,
    # beta=0) reduces to a per-channel scale 1/sqrt(1+eps); folded into the
    # weight matrices / biases, leaving only a bias add in the kernel.
    # TODO(synk): for a trained checkpoint, fold the actual running stats and
    # affine params instead of the defaults.
    inv = 1.0 / np.sqrt(1.0 + BN_EPS)
    for _ in range(num_layers):
        w1 = jax.random.normal(next(keys), (d_in, 2 * hid_dim), jnp.float32) * 0.1
        b1 = jax.random.normal(next(keys), (2 * hid_dim,), jnp.float32) * 0.1
        w2 = jax.random.normal(next(keys), (2 * hid_dim, hid_dim), jnp.float32) * 0.1
        b2 = jax.random.normal(next(keys), (hid_dim,), jnp.float32) * 0.1
        params["gin_layers"].append(dict(
            eps=0.0,                                    # GINConv(train_eps=True) init
            w1=(w1 * inv).astype(jnp.bfloat16),         # mlp-BN scale folded into W1
            t1=(b1 * inv)[None, :].astype(jnp.float32),
            w2=(w2 * inv).astype(jnp.bfloat16),         # outer-BN scale folded into W2
            t2=(b2 * inv)[None, :].astype(jnp.float32),
        ))
        d_in = hid_dim
    # EdgePooling: Linear(2*hid, 1) split over [x_src || x_dst]; padded to a
    # 128-lane slab so the Pallas store is lane-dense (slab stored in bf16).
    we = jax.random.normal(next(keys), (2 * hid_dim,), jnp.float32) * 0.1
    we_pad = jnp.zeros((hid_dim, PROJ_PAD), jnp.float32)
    we_pad = we_pad.at[:, 0].set(we[:hid_dim]).at[:, 1].set(we[hid_dim:])
    params["edge_w_pad"] = we_pad.astype(jnp.bfloat16)
    params["edge_b"] = jnp.float32(0.05)
    # lin1 + batch_norm1 (eval) folded; lin2 plain
    wl1 = jax.random.normal(next(keys), (hid_dim, hid_dim), jnp.float32) * 0.1
    bl1 = jax.random.normal(next(keys), (hid_dim,), jnp.float32) * 0.1
    params["lin1_w"] = (wl1 * inv).astype(jnp.bfloat16)
    params["bn1_t"] = (bl1 * inv)[None, :].astype(jnp.float32)
    params["lin2_w"] = (jax.random.normal(next(keys), (hid_dim, output_dim),
                                          jnp.float32) * 0.1).astype(jnp.bfloat16)
    params["lin2_b"] = (jax.random.normal(next(keys), (output_dim,),
                                          jnp.float32) * 0.1)[None, :]
    return params


def global_edge_forward(params, x, edge_index, batch, num_graphs, y_len):
    n = x.shape[0]
    n_pad = _pad_nodes(n)
    src_np = np.asarray(edge_index[0])
    dst_np = np.asarray(edge_index[1])
    src = jnp.asarray(src_np)
    dst = jnp.asarray(dst_np)

    # All layers share one eps here (GINConv(train_eps=True) init), so the
    # (1+eps) self term is folded into the adjacency diagonal ONCE.
    eps_vals = {float(lp["eps"]) for lp in params["gin_layers"]}
    assert len(eps_vals) == 1  # TODO(synk): per-layer eps needs per-layer diagonals
    eps = eps_vals.pop()

    # Dense A_hat[i, j] = #edges j->i + (1+eps)*[i==j], built once on device;
    # padded rows/cols are zero and therefore inert in every layer.
    # TODO(synk): for large sparse graphs replace the dense A@h with a
    # block-sparse aggregation (scalar-prefetched list of nonzero column tiles);
    # on v7x the adjacency could additionally be stored in fp8 e4m3.
    diag = jnp.arange(n)
    adj = (jnp.zeros((n_pad, n_pad), jnp.float32)
           .at[dst, src].add(1.0)
           .at[diag, diag].add(1.0 + eps)
           .astype(jnp.bfloat16))

    x_pad = jnp.zeros((n_pad, x.shape[1]), jnp.bfloat16).at[:n, :].set(
        x.astype(jnp.bfloat16))

    # ---- GIN layers (row-tiled Pallas); last layer fuses the score proj ----
    h = x_pad
    layers = params["gin_layers"]
    proj = None
    for li, lp in enumerate(layers):
        if li == len(layers) - 1:
            h, proj = run_gin_layer(adj, h, lp, we_pad=params["edge_w_pad"])
        else:
            h = run_gin_layer(adj, h, lp)

    # ---- EdgePooling: per-edge score, softmax grouped by dst, +0.5 ----------
    proj_f32 = proj.astype(jnp.float32)
    raw = proj_f32[src, 0] + proj_f32[dst, 1] + params["edge_b"]  # dropout p=0
    score = segment_softmax(raw, dst, n) + 0.5                    # add_to_edge_score

    cluster, cluster_scores = greedy_edge_merge(
        np.asarray(jax.device_get(score)), src_np, dst_np, n)

    # global_add_pool of score-weighted contracted clusters == per-node weight
    # w[i] = score(cluster(i)); only this length-N vector goes back to device,
    # h stays resident and the reduction runs as a device-side segment_sum.
    node_w = jnp.asarray(cluster_scores[cluster], dtype=jnp.float32)   # [n]
    embedding = jax.ops.segment_sum(
        h[:n].astype(jnp.float32) * node_w[:, None],
        jnp.asarray(batch), num_segments=num_graphs)

    # ---- tiny G-row MLP head: plain XLA (a pallas_call is pure overhead here)
    if y_len != 1:
        z = jnp.dot(embedding.astype(jnp.bfloat16), params["lin1_w"],
                    preferred_element_type=jnp.float32) + params["bn1_t"]
    else:
        z = embedding
    z = jnp.maximum(z, 0.0)                      # F.dropout(training=False) -> identity
    logits = jnp.dot(z.astype(jnp.bfloat16), params["lin2_w"],
                     preferred_element_type=jnp.float32) + params["lin2_b"]
    return embedding, logits


# ----------------------------------- main --------------------------------------

if __name__ == "__main__":
    input_dim, hid_dim, output_dim, num_layers = 8, 32, 4, 2

    # two small graphs: 6-node undirected rings with one chord (both directions)
    def ring_edges(offset, nn):
        e = []
        for i in range(nn):
            a, b = offset + i, offset + (i + 1) % nn
            e.append((a, b)); e.append((b, a))
        e.append((offset, offset + 3)); e.append((offset + 3, offset))
        return e

    edges = ring_edges(0, 6) + ring_edges(6, 6)
    edge_index = np.asarray(edges, dtype=np.int32).T          # [2, 28]
    batch = np.asarray([0] * 6 + [1] * 6, dtype=np.int32)     # [12]
    num_graphs = 2
    y = np.zeros((num_graphs,), dtype=np.int32)                # data.y (shape gate)

    key = jax.random.PRNGKey(0)
    kx, kp = jax.random.split(key)
    x = jax.random.normal(kx, (12, input_dim), jnp.float32)    # data.x
    params = init_params(kp, input_dim, hid_dim, output_dim, num_layers)

    embedding, logits = global_edge_forward(params, x, edge_index, batch,
                                            num_graphs, y_len=int(y.shape[0]))
    jax.block_until_ready((embedding, logits))
    assert embedding.shape == (num_graphs, hid_dim)
    assert logits.shape == (num_graphs, output_dim)
    assert bool(jnp.all(jnp.isfinite(embedding))) and bool(jnp.all(jnp.isfinite(logits)))
    print("KERNEL_OK")
</pallas_src>

<mosaic_0001>
module attributes {stable_mosaic.version = 11 : i64} {
  func.func @kernel(%arg0: i32, %arg1: i32, %arg2: memref<16x16xbf16, #tpu.memory_space<vmem>>, %arg3: memref<16x8xbf16, #tpu.memory_space<vmem>>, %arg4: memref<8x64xbf16, #tpu.memory_space<vmem>>, %arg5: memref<1x64xf32, #tpu.memory_space<vmem>>, %arg6: memref<64x32xbf16, #tpu.memory_space<vmem>>, %arg7: memref<1x32xf32, #tpu.memory_space<vmem>>, %arg8: memref<16x32xbf16, #tpu.memory_space<vmem>>, %arg9: memref<16x8xf32, #tpu.memory_space<vmem>>) attributes {dimension_semantics = [#tpu.dimension_semantics<parallel>, #tpu.dimension_semantics<arbitrary>], iteration_bounds = array<i64: 1, 1>, scalar_prefetch = 0 : i64, scratch_operands = 1 : i64, tpu.core_type = #tpu.core_type<tc>, window_params = [{transform_indices = @transform_0, window_bounds = array<i64: 16, 16>}, {transform_indices = @transform_1, window_bounds = array<i64: 16, 8>}, {pipeline_mode = #tpu.pipeline_mode<synchronous>, transform_indices = @transform_2, window_bounds = array<i64: 8, 64>}, {pipeline_mode = #tpu.pipeline_mode<synchronous>, transform_indices = @transform_3, window_bounds = array<i64: 1, 64>}, {pipeline_mode = #tpu.pipeline_mode<synchronous>, transform_indices = @transform_4, window_bounds = array<i64: 64, 32>}, {pipeline_mode = #tpu.pipeline_mode<synchronous>, transform_indices = @transform_5, window_bounds = array<i64: 1, 32>}, {transform_indices = @transform_6, window_bounds = array<i64: 16, 32>}]} {
    %c0_i32 = arith.constant 0 : i32
    %0 = arith.cmpi eq, %arg1, %c0_i32 : i32
    %1 = arith.extui %0 : i1 to i32
    %c0_i32_0 = arith.constant 0 : i32
    %2 = arith.cmpi ne, %1, %c0_i32_0 : i32
    scf.if %2 {
      %cst_10 = arith.constant 0.000000e+00 : f32
      %12 = vector.broadcast %cst_10 : f32 to vector<16x8xf32>
      %c0_11 = arith.constant 0 : index
      %c0_12 = arith.constant 0 : index
      %13 = vector.load %arg9[%c0_11, %c0_12] : memref<16x8xf32, #tpu.memory_space<vmem>>, vector<16x8xf32>
      tpu.vector_store %arg9[%c0_11, %c0_12], %12 {strides = array<i32>} : memref<16x8xf32, #tpu.memory_space<vmem>>, vector<16x8xf32>,
    } else {
    }
    %c0 = arith.constant 0 : index
    %c0_1 = arith.constant 0 : index
    %3 = vector.load %arg9[%c0, %c0_1] : memref<16x8xf32, #tpu.memory_space<vmem>>, vector<16x8xf32>
    %c0_2 = arith.constant 0 : index
    %c0_3 = arith.constant 0 : index
    %4 = vector.load %arg2[%c0_2, %c0_3] : memref<16x16xbf16, #tpu.memory_space<vmem>>, vector<16x16xbf16>
    %c0_4 = arith.constant 0 : index
    %c0_5 = arith.constant 0 : index
    %5 = vector.load %arg3[%c0_4, %c0_5] : memref<16x8xbf16, #tpu.memory_space<vmem>>, vector<16x8xbf16>
    %cst = arith.constant dense<0.000000e+00> : vector<16x8xf32>
    %6 = tpu.matmul %4, %5, %cst {dimension_numbers = #tpu.dot_dimension_numbers<[1], [0], [0], [1], [0, 0, 1, 1], [], []>} : vector<16x16xbf16>, vector<16x8xbf16>, vector<16x8xf32> -> vector<16x8xf32>
    %7 = arith.addf %3, %6 : vector<16x8xf32>
    %c0_6 = arith.constant 0 : index
    %c0_7 = arith.constant 0 : index
    %8 = vector.load %arg9[%c0_6, %c0_7] : memref<16x8xf32, #tpu.memory_space<vmem>>, vector<16x8xf32>
    tpu.vector_store %arg9[%c0_6, %c0_7], %7 {strides = array<i32>} : memref<16x8xf32, #tpu.memory_space<vmem>>, vector<16x8xf32>,
    %c0_i32_8 = arith.constant 0 : i32
    %9 = arith.cmpi eq, %arg1, %c0_i32_8 : i32
    %10 = arith.extui %9 : i1 to i32
    %c0_i32_9 = arith.constant 0 : i32
    %11 = arith.cmpi ne, %10, %c0_i32_9 : i32
    scf.if %11 {
      %c0_10 = arith.constant 0 : index
      %c0_11 = arith.constant 0 : index
      %12 = vector.load %arg9[%c0_10, %c0_11] : memref<16x8xf32, #tpu.memory_space<vmem>>, vector<16x8xf32>
      %13 = arith.truncf %12 : vector<16x8xf32> to vector<16x8xbf16>
      %c0_12 = arith.constant 0 : index
      %c0_13 = arith.constant 0 : index
      %14 = vector.load %arg4[%c0_12, %c0_13] : memref<8x64xbf16, #tpu.memory_space<vmem>>, vector<8x64xbf16>
      %cst_14 = arith.constant dense<0.000000e+00> : vector<16x64xf32>
      %15 = tpu.matmul %13, %14, %cst_14 {dimension_numbers = #tpu.dot_dimension_numbers<[1], [0], [0], [1], [0, 0, 1, 1], [], []>} : vector<16x8xbf16>, vector<8x64xbf16>, vector<16x64xf32> -> vector<16x64xf32>
      %c0_15 = arith.constant 0 : index
      %c0_16 = arith.constant 0 : index
      %16 = vector.load %arg5[%c0_15, %c0_16] : memref<1x64xf32, #tpu.memory_space<vmem>>, vector<1x64xf32>
      %17 = vector.broadcast %16 : vector<1x64xf32> to vector<16x64xf32>
      %18 = arith.addf %15, %17 : vector<16x64xf32>
      %cst_17 = arith.constant 0.000000e+00 : f32
      %19 = vector.broadcast %cst_17 : f32 to vector<16x64xf32>
      %20 = arith.maximumf %18, %19 : vector<16x64xf32>
      %21 = arith.truncf %20 : vector<16x64xf32> to vector<16x64xbf16>
      %c0_18 = arith.constant 0 : index
      %c0_19 = arith.constant 0 : index
      %22 = vector.load %arg6[%c0_18, %c0_19] : memref<64x32xbf16, #tpu.memory_space<vmem>>, vector<64x32xbf16>
      %cst_20 = arith.constant dense<0.000000e+00> : vector<16x32xf32>
      %23 = tpu.matmul %21, %22, %cst_20 {dimension_numbers = #tpu.dot_dimension_numbers<[1], [0], [0], [1], [0, 0, 1, 1], [], []>} : vector<16x64xbf16>, vector<64x32xbf16>, vector<16x32xf32> -> vector<16x32xf32>
      %c0_21 = arith.constant 0 : index
      %c0_22 = arith.constant 0 : index
      %24 = vector.load %arg7[%c0_21, %c0_22] : memref<1x32xf32, #tpu.memory_space<vmem>>, vector<1x32xf32>
      %25 = vector.broadcast %24 : vector<1x32xf32> to vector<16x32xf32>
      %26 = arith.addf %23, %25 : vector<16x32xf32>
      %cst_23 = arith.constant 0.000000e+00 : f32
      %27 = vector.broadcast %cst_23 : f32 to vector<16x32xf32>
      %28 = arith.maximumf %26, %27 : vector<16x32xf32>
      %29 = arith.truncf %28 : vector<16x32xf32> to vector<16x32xbf16>
      %c0_24 = arith.constant 0 : index
      %c0_25 = arith.constant 0 : index
      %30 = vector.load %arg8[%c0_24, %c0_25] : memref<16x32xbf16, #tpu.memory_space<vmem>>, vector<16x32xbf16>
      tpu.vector_store %arg8[%c0_24, %c0_25], %29 {strides = array<i32>} : memref<16x32xbf16, #tpu.memory_space<vmem>>, vector<16x32xbf16>,
    } else {
    }
    return
  }
  func.func @transform_0(%arg0: i32, %arg1: i32) -> (i32, i32) {
    %c0_i32 = arith.constant 0 : i32
    return %arg0, %arg1 : i32, i32
  }
  func.func @transform_1(%arg0: i32, %arg1: i32) -> (i32, i32) {
    %c0_i32 = arith.constant 0 : i32
    %c0_i32_0 = arith.constant 0 : i32
    return %arg1, %c0_i32 : i32, i32
  }
  func.func @transform_2(%arg0: i32, %arg1: i32) -> (i32, i32) {
    %c0_i32 = arith.constant 0 : i32
    %c0_i32_0 = arith.constant 0 : i32
    %c0_i32_1 = arith.constant 0 : i32
    return %c0_i32, %c0_i32_0 : i32, i32
  }
  func.func @transform_3(%arg0: i32, %arg1: i32) -> (i32, i32) {
    %c0_i32 = arith.constant 0 : i32
    %c0_i32_0 = arith.constant 0 : i32
    %c0_i32_1 = arith.constant 0 : i32
    return %c0_i32, %c0_i32_0 : i32, i32
  }
  func.func @transform_4(%arg0: i32, %arg1: i32) -> (i32, i32) {
    %c0_i32 = arith.constant 0 : i32
    %c0_i32_0 = arith.constant 0 : i32
    %c0_i32_1 = arith.constant 0 : i32
    return %c0_i32, %c0_i32_0 : i32, i32
  }
  func.func @transform_5(%arg0: i32, %arg1: i32) -> (i32, i32) {
    %c0_i32 = arith.constant 0 : i32
    %c0_i32_0 = arith.constant 0 : i32
    %c0_i32_1 = arith.constant 0 : i32
    return %c0_i32, %c0_i32_0 : i32, i32
  }
  func.func @transform_6(%arg0: i32, %arg1: i32) -> (i32, i32) {
    %c0_i32 = arith.constant 0 : i32
    %c0_i32_0 = arith.constant 0 : i32
    return %arg0, %c0_i32 : i32, i32
  }
}

</mosaic_0001>

<llo_original>
// kernel: tpu_custom_call.1
$region0: #{tpu_custom_call.1}
  #allocation0 [shape = 'u32[]', space=smem, size = 0x4, offset = 0x4, fixed_abs, tag = 'smem constant byte address 0x4 - core index']
  #allocation1 [shape = 'u32[144,128]{1,0:T(1,128)}', space=vmem, size = 0x12000, scoped, tag = 'internal scratch']
  #allocation2 [shape = 'f32[16,8]{1,0:T(8,128)}', space=vmem, size = 0x2000, scoped, tag = 'scratch operand']
  %s0 = inlined_call_operand.hbm [shape: bf16[16,16], index: 0, kind: input, shape index: {}]
  %s1 = inlined_call_operand.hbm [shape: bf16[16,8], index: 1, kind: input, shape index: {}]
  %s2 = inlined_call_operand.hbm [shape: bf16[8,64], index: 2, kind: input, shape index: {}]
  %s3 = inlined_call_operand.hbm [shape: f32[1,64], index: 3, kind: input, shape index: {}]
  %s4 = inlined_call_operand.hbm [shape: bf16[64,32], index: 4, kind: input, shape index: {}]
  %s5 = inlined_call_operand.hbm [shape: f32[1,32], index: 5, kind: input, shape index: {}]
  %s6 = inlined_call_operand.hbm [shape: bf16[16,32], index: 6, kind: output, shape index: {}]
  %s7 = sld [smem:[#allocation0]]
  $region66: #{tpu_custom_call.1} parent=0
    _
  %s9 = ssub.s32 1, %s7
  %s10 = scalar_select 0, %s9, %s7
  $region1: #{tpu_custom_call.1} parent=0
    #allocation3 [shape = 'u8[4096]{0}', space=vmem, size = 0x1000, scoped, tag = 'input window, operand 0, single buffered']
    #allocation4 [shape = 's32[1]{0}', space=sflag, size = 0x4, scoped, tag = 'scoped memory for tpu_custom_call.1']
    #allocation5 [shape = 's32[1]{0}', space=sflag, size = 0x4, scoped, tag = 'scoped memory for tpu_custom_call.1']
    #allocation6 [shape = 'u8[4096]{0}', space=vmem, size = 0x1000, scoped, tag = 'input window, operand 1, single buffered']
    #allocation7 [shape = 's32[1]{0}', space=sflag, size = 0x4, scoped, tag = 'scoped memory for tpu_custom_call.1']
    #allocation8 [shape = 'u8[2048]{0}', space=vmem, size = 0x800, scoped, tag = 'input window, operand 2, single buffered']
    #allocation9 [shape = 'u8[512]{0}', space=vmem, size = 0x400, scoped, tag = 'input window, operand 3, single buffered']
    #allocation10 [shape = 's32[1]{0}', space=sflag, size = 0x4, scoped, tag = 'scoped memory for tpu_custom_call.1']
    #allocation11 [shape = 'u8[16384]{0}', space=vmem, size = 0x4000, scoped, tag = 'input window, operand 4, single buffered']
    #allocation12 [shape = 'u8[512]{0}', space=vmem, size = 0x400, scoped, tag = 'input window, operand 5, single buffered']
    #allocation13 [shape = 's32[1]{0}', space=sflag, size = 0x4, scoped, tag = 'scoped memory for tpu_custom_call.1']
    #allocation14 [shape = 'u8[4096]{0}', space=vmem, size = 0x1000, scoped, tag = 'output window, operand 0, single buffered']
    %11 = vsyncpa [#allocation4], 0
    %12 = vsyncpa [#allocation7], 0
    %13 = vsyncpa [#allocation10], 0
    %14 = vsyncpa [#allocation13], 0
    %15 = vsyncpa [#allocation5], 0
    // Predicated region
    $region2: #{tpu_custom_call.1} parent=1 // pred_check
      _
    $region3: #{tpu_custom_call.1} parent=1 // pred_check_branch
      %17 = sbr.rel (0) target = $region5
    $region4: #{tpu_custom_call.1} parent=1 // pred_region
      %s19 = ssub.s32 128, 128
      %20 = vsyncadd [#allocation4], %s19
      %s21 = sshll.u32 [#allocation3], 4
      %s22 = int_to_ptr.vmem [resolvable:$true] %s21
      %27 = dma.hbm_to_vmem [thread:$0]  %s0, 128, %s22, [#allocation4], 64, 64, 4
    $region5: #{tpu_custom_call.1} parent=1 // pred_fallthru
      _
    // Predicated region
    $region6: #{tpu_custom_call.1} parent=1 // pred_check
      _
    $region7: #{tpu_custom_call.1} parent=1 // pred_check_branch
      %29 = sbr.rel (0) target = $region9
    $region8: #{tpu_custom_call.1} parent=1 // pred_region
      %s31 = ssub.s32 128, 128
      %32 = vsyncadd [#allocation7], %s31
      %s33 = sshll.u32 [#allocation6], 4
      %s34 = int_to_ptr.vmem [resolvable:$true] %s33
      %39 = dma.hbm_to_vmem [thread:$0]  %s1, 128, %s34, [#allocation7], 64, 64, 4
    $region9: #{tpu_custom_call.1} parent=1 // pred_fallthru
      _
    // Predicated region
    $region10: #{tpu_custom_call.1} parent=1 // pred_check
      _
    $region11: #{tpu_custom_call.1} parent=1 // pred_check_branch
      %41 = sbr.rel (0) target = $region13
    $region12: #{tpu_custom_call.1} parent=1 // pred_region
      %s43 = ssub.s32 64, 64
      %44 = vsyncadd [#allocation7], %s43
      %s46 = sshll.u32 [#allocation8], 4
      %s47 = int_to_ptr.vmem [resolvable:$true] %s46
      %49 = dma.hbm_to_vmem [thread:$0]  %s2, 64, %s47, [#allocation7]
    $region13: #{tpu_custom_call.1} parent=1 // pred_fallthru
      _
    // Predicated region
    $region14: #{tpu_custom_call.1} parent=1 // pred_check
      _
    $region15: #{tpu_custom_call.1} parent=1 // pred_check_branch
      %51 = sbr.rel (0) target = $region17
    $region16: #{tpu_custom_call.1} parent=1 // pred_region
      %s53 = ssub.s32 16, 16
      %54 = vsyncadd [#allocation10], %s53
      %s56 = sshll.u32 [#allocation9], 4
      %s57 = int_to_ptr.vmem [resolvable:$true] %s56
      %59 = dma.hbm_to_vmem [thread:$0]  %s3, 16, %s57, [#allocation10]
    $region17: #{tpu_custom_call.1} parent=1 // pred_fallthru
      _
    // Predicated region
    $region18: #{tpu_custom_call.1} parent=1 // pred_check
      _
    $region19: #{tpu_custom_call.1} parent=1 // pred_check_branch
      %61 = sbr.rel (0) target = $region21
    $region20: #{tpu_custom_call.1} parent=1 // pred_region
      %s63 = ssub.s32 512, 512
      %64 = vsyncadd [#allocation10], %s63
      %s65 = sshll.u32 [#allocation11], 4
      %s66 = int_to_ptr.vmem [resolvable:$true] %s65
      %71 = dma.hbm_to_vmem [thread:$0]  %s4, 512, %s66, [#allocation10], 64, 64, 4
    $region21: #{tpu_custom_call.1} parent=1 // pred_fallthru
      _
    // Predicated region
    $region22: #{tpu_custom_call.1} parent=1 // pred_check
      _
    $region23: #{tpu_custom_call.1} parent=1 // pred_check_branch
      %73 = sbr.rel (0) target = $region25
    $region24: #{tpu_custom_call.1} parent=1 // pred_region
      %s75 = ssub.s32 16, 16
      %76 = vsyncadd [#allocation13], %s75
      %s78 = sshll.u32 [#allocation12], 4
      %s79 = int_to_ptr.vmem [resolvable:$true] %s78
      %81 = dma.hbm_to_vmem [thread:$0]  %s5, 16, %s79, [#allocation13]
    $region25: #{tpu_custom_call.1} parent=1 // pred_fallthru
      _
    // Predicated region
    $region26: #{tpu_custom_call.1} parent=1 // pred_check
      _
    $region27: #{tpu_custom_call.1} parent=1 // pred_check_branch
      %83 = sbr.rel (0) target = $region29
    $region28: #{tpu_custom_call.1} parent=1 // pred_region
      %84 = dma.done [#allocation4], 128
    $region29: #{tpu_custom_call.1} parent=1 // pred_fallthru
      _
    // Predicated region
    $region30: #{tpu_custom_call.1} parent=1 // pred_check
      _
    $region31: #{tpu_custom_call.1} parent=1 // pred_check_branch
      %86 = sbr.rel (0) target = $region33
    $region32: #{tpu_custom_call.1} parent=1 // pred_region
      %87 = dma.done [#allocation7], 128
    $region33: #{tpu_custom_call.1} parent=1 // pred_fallthru
      _
    // Predicated region
    $region34: #{tpu_custom_call.1} parent=1 // pred_check
      _
    $region35: #{tpu_custom_call.1} parent=1 // pred_check_branch
      %89 = sbr.rel (0) target = $region37
    $region36: #{tpu_custom_call.1} parent=1 // pred_region
      %90 = dma.done [#allocation7], 64
    $region37: #{tpu_custom_call.1} parent=1 // pred_fallthru
      _
    // Predicated region
    $region38: #{tpu_custom_call.1} parent=1 // pred_check
      _
    $region39: #{tpu_custom_call.1} parent=1 // pred_check_branch
      %92 = sbr.rel (0) target = $region41
    $region40: #{tpu_custom_call.1} parent=1 // pred_region
      %93 = dma.done [#allocation10], 16
    $region41: #{tpu_custom_call.1} parent=1 // pred_fallthru
      _
    // Predicated region
    $region42: #{tpu_custom_call.1} parent=1 // pred_check
      _
    $region43: #{tpu_custom_call.1} parent=1 // pred_check_branch
      %95 = sbr.rel (0) target = $region45
    $region44: #{tpu_custom_call.1} parent=1 // pred_region
      %96 = dma.done [#allocation10], 512
    $region45: #{tpu_custom_call.1} parent=1 // pred_fallthru
      _
    // Predicated region
    $region46: #{tpu_custom_call.1} parent=1 // pred_check
      _
    $region47: #{tpu_custom_call.1} parent=1 // pred_check_branch
      %98 = sbr.rel (0) target = $region49
    $region48: #{tpu_custom_call.1} parent=1 // pred_region
      %99 = dma.done [#allocation13], 16
    $region49: #{tpu_custom_call.1} parent=1 // pred_fallthru
      _
    %p101 = scmp.eq.s32.totalorder 0, 0
    // Predicated region
    $region50: #{tpu_custom_call.1} parent=1 // pred_check
      %p102 = pneg %p101
    $region51: #{tpu_custom_call.1} parent=1 // pred_check_branch
      %104 = sbr.rel (%p102) target = $region53
    $region52: #{tpu_custom_call.1} parent=1 // pred_region
      %vm105 = vcmask 64512
      %106 = vst.msk [vmem:[#allocation2] sm:$0xff] %vm105, 0.0
      %107 = vst.msk [vmem:[#allocation2 + $0x8] sm:$0xff] %vm105, 0.0
    $region53: #{tpu_custom_call.1} parent=1 // pred_fallthru
      _
    %v108 = vld [vmem:[#allocation2] sm:$0xff]
    %v109 = vld [vmem:[#allocation2 + $0x8] sm:$0xff]
    %v110 = vld [vmem:[#allocation3] sm:$0xf]
    %v111 = vld [vmem:[#allocation3 + $0x4] sm:$0xf]
    %v112 = vld [vmem:[#allocation6] sm:$0xf]
    %v113 = vld [vmem:[#allocation6 + $0x4] sm:$0xf]
    %v116 = vunpack.c.l.b16 %v110
    %v117 = vunpack.c.l.b16 %v111
    %v118 = vpack.c.b16 %v117, %v116
    %v121 = vunpack.c.l.b16 %v112
    %v122 = vunpack.c.l.b16 %v113
    %v123 = vpack.c.b16 %v122, %v121
    %vm125 = vcmask 130048
    %v127 = vsel %vm125, %v118, 0
    %129 = vmatprep.subr.bf16.mxu0 0
    %130 = vmatpush1.bf16.msra.mxu0 %v123
    %131 = vmatprep.subr.bf16.mxu0 0
    %132 = vmatpush1.bf16.msra.mxu0 0
    %133 = vmatprep.subr.bf16.mxu0 0
    %134 = vmatpush1.bf16.msra.mxu0 0
    %135 = vmatprep.subr.bf16.mxu0 0
    %136 = vmatpush1.bf16.msra.mxu0 0
    %137 = vmatprep.subr.bf16.mxu0 0
    %138 = vmatpush1.bf16.msra.mxu0 0
    %139 = vmatprep.subr.bf16.mxu0 0
    %140 = vmatpush1.bf16.msra.mxu0 0
    %141 = vmatprep.subr.bf16.mxu0 0
    %142 = vmatpush1.bf16.msra.mxu0 0
    %143 = vmatprep.subr.bf16.mxu0 0
    %144 = vmatpush1.bf16.msra.mxu0 0
    %145 = vmatprep.subr.bf16.mxu0 0
    %146 = vmatpush1.bf16.msra.mxu0 0
    %147 = vmatprep.subr.bf16.mxu0 0
    %148 = vmatpush1.bf16.msra.mxu0 0
    %149 = vmatprep.subr.bf16.mxu0 0
    %150 = vmatpush1.bf16.msra.mxu0 0
    %151 = vmatprep.subr.bf16.mxu0 0
    %152 = vmatpush1.bf16.msra.mxu0 0
    %153 = vmatprep.subr.bf16.mxu0 0
    %154 = vmatpush1.bf16.msra.mxu0 0
    %155 = vmatprep.subr.bf16.mxu0 0
    %156 = vmatpush1.bf16.msra.mxu0 0
    %157 = vmatprep.subr.bf16.mxu0 0
    %158 = vmatpush1.bf16.msra.mxu0 0
    %159 = vmatprep.subr.bf16.mxu0 0
    %160 = vmatpush1.bf16.msra.mxu0 0
    %161 = vmatprep.mubr.bf16.mxu0 0
    %162 = vmatmul.mubr.bf16.gmra.mrb[0].mxu0 %v127
    %v163 = vpop.f32.mrb[0].mxu0
    %v164 = vadd.f32 0.0, %v163
    %v165 = vpop.f32.mrb[0].mxu0
    %v166 = vpop.f32.mrb[0].mxu0
    %v167 = vadd.f32 0.0, %v166
    %v168 = vpop.f32.mrb[0].mxu0
    %169 = vdwg.mxu0
    %v170 = vadd.f32 %v108, %v164
    %v171 = vadd.f32 %v109, %v167
    %vm172 = vcmask 64512
    %173 = vst.msk [vmem:[#allocation2] sm:$0xff] %vm172, %v170
    %174 = vst.msk [vmem:[#allocation2 + $0x8] sm:$0xff] %vm172, %v171
    // Predicated region
    $region54: #{tpu_custom_call.1} parent=1 // pred_check
      %p175 = pneg %p101
    $region55: #{tpu_custom_call.1} parent=1 // pred_check_branch
      %177 = sbr.rel (%p175) target = $region57
    $region56: #{tpu_custom_call.1} parent=1 // pred_region
      %v178 = vld [vmem:[#allocation2] sm:$0xff]
      %v179 = vld [vmem:[#allocation2 + $0x8] sm:$0xff]
      %v180 = vpack.c.bf16 %v179, %v178
      %v181 = vld [vmem:[#allocation8] sm:$0xf]
      %v182 = vld [vmem:[#allocation9] sm:$0x1]
      %v184 = vlaneseq
      %v185 = vshrl.u32 %v184, 7
      %v186 = vsub.s32 0, %v185
      %v187 = vrot.slane %v182, %v186
      %v190 = vsel %vm172, %v180, 0
      %vm192 = vcmask 1043456
      %v194 = vsel %vm192, %v181, 0
      %196 = vmatprep.subr.bf16.mxu0 0
      %197 = vmatpush1.bf16.msra.mxu0 %v194
      %198 = vmatprep.subr.bf16.mxu0 0
      %199 = vmatpush1.bf16.msra.mxu0 0
      %200 = vmatprep.subr.bf16.mxu0 0
      %201 = vmatpush1.bf16.msra.mxu0 0
      %202 = vmatprep.subr.bf16.mxu0 0
      %203 = vmatpush1.bf16.msra.mxu0 0
      %204 = vmatprep.subr.bf16.mxu0 0
      %205 = vmatpush1.bf16.msra.mxu0 0
      %206 = vmatprep.subr.bf16.mxu0 0
      %207 = vmatpush1.bf16.msra.mxu0 0
      %208 = vmatprep.subr.bf16.mxu0 0
      %209 = vmatpush1.bf16.msra.mxu0 0
      %210 = vmatprep.subr.bf16.mxu0 0
      %211 = vmatpush1.bf16.msra.mxu0 0
      %212 = vmatprep.subr.bf16.mxu0 0
      %213 = vmatpush1.bf16.msra.mxu0 0
      %214 = vmatprep.subr.bf16.mxu0 0
      %215 = vmatpush1.bf16.msra.mxu0 0
      %216 = vmatprep.subr.bf16.mxu0 0
      %217 = vmatpush1.bf16.msra.mxu0 0
      %218 = vmatprep.subr.bf16.mxu0 0
      %219 = vmatpush1.bf16.msra.mxu0 0
      %220 = vmatprep.subr.bf16.mxu0 0
      %221 = vmatpush1.bf16.msra.mxu0 0
      %222 = vmatprep.subr.bf16.mxu0 0
      %223 = vmatpush1.bf16.msra.mxu0 0
      %224 = vmatprep.subr.bf16.mxu0 0
      %225 = vmatpush1.bf16.msra.mxu0 0
      %226 = vmatprep.subr.bf16.mxu0 0
      %227 = vmatpush1.bf16.msra.mxu0 0
      %228 = vmatprep.mubr.bf16.mxu0 0
      %229 = vmatmul.mubr.bf16.gmra.mrb[0].mxu0 %v190
      %v230 = vpop.f32.mrb[0].mxu0
      %v231 = vadd.f32 %v187, %v230
      %v232 = vpop.f32.mrb[0].mxu0
      %v233 = vpop.f32.mrb[0].mxu0
      %v234 = vadd.f32 %v187, %v233
      %v235 = vpop.f32.mrb[0].mxu0
      %236 = vdwg.mxu0
      %v237 = vmax.f32 %v231, 0.0
      %v238 = vmax.f32 %v234, 0.0
      %v239 = vpack.c.bf16 %v238, %v237
      %v240 = vld [vmem:[#allocation11] sm:$0xf]
      %v241 = vld [vmem:[#allocation11 + $0x4] sm:$0xf]
      %v242 = vld [vmem:[#allocation11 + $0x8] sm:$0xf]
      %v243 = vld [vmem:[#allocation11 + $0xc] sm:$0xf]
      %v244 = vld [vmem:[#allocation11 + $0x10] sm:$0xf]
      %v245 = vld [vmem:[#allocation11 + $0x14] sm:$0xf]
      %v246 = vld [vmem:[#allocation11 + $0x18] sm:$0xf]
      %v247 = vld [vmem:[#allocation11 + $0x1c] sm:$0xf]
      %v248 = vld [vmem:[#allocation12] sm:$0x1]
      %v250 = vlaneseq
      %v251 = vshrl.u32 %v250, 7
      %v252 = vsub.s32 0, %v251
      %v253 = vrot.slane %v248, %v252
      %v263 = vunpack.c.l.b16 %v240
      %v264 = vunpack.c.l.b16 %v241
      %v265 = vunpack.c.l.b16 %v242
      %v266 = vunpack.c.l.b16 %v243
      %v267 = vunpack.c.l.b16 %v244
      %v268 = vunpack.c.l.b16 %v245
      %v269 = vunpack.c.l.b16 %v246
      %v270 = vunpack.c.l.b16 %v247
      %v271 = vpack.c.b16 %v264, %v263
      %v272 = vpack.c.b16 %v266, %v265
      %v273 = vpack.c.b16 %v268, %v267
      %v274 = vpack.c.b16 %v270, %v269
      %vm279 = vcmask 523264
      %v281 = vsel %vm279, %v239, 0
      %283 = vmatprep.subr.bf16.mxu0 0
      %284 = vmatpush1.bf16.msra.mxu0 %v271
      %285 = vmatprep.subr.bf16.mxu0 0
      %286 = vmatpush1.bf16.msra.mxu0 %v272
      %287 = vmatprep.subr.bf16.mxu0 0
      %288 = vmatpush1.bf16.msra.mxu0 %v273
      %289 = vmatprep.subr.bf16.mxu0 0
      %290 = vmatpush1.bf16.msra.mxu0 %v274
      %291 = vmatprep.subr.bf16.mxu0 0
      %292 = vmatpush1.bf16.msra.mxu0 0
      %293 = vmatprep.subr.bf16.mxu0 0
      %294 = vmatpush1.bf16.msra.mxu0 0
      %295 = vmatprep.subr.bf16.mxu0 0
      %296 = vmatpush1.bf16.msra.mxu0 0
      %297 = vmatprep.subr.bf16.mxu0 0
      %298 = vmatpush1.bf16.msra.mxu0 0
      %299 = vmatprep.subr.bf16.mxu0 0
      %300 = vmatpush1.bf16.msra.mxu0 0
      %301 = vmatprep.subr.bf16.mxu0 0
      %302 = vmatpush1.bf16.msra.mxu0 0
      %303 = vmatprep.subr.bf16.mxu0 0
      %304 = vmatpush1.bf16.msra.mxu0 0
      %305 = vmatprep.subr.bf16.mxu0 0
      %306 = vmatpush1.bf16.msra.mxu0 0
      %307 = vmatprep.subr.bf16.mxu0 0
      %308 = vmatpush1.bf16.msra.mxu0 0
      %309 = vmatprep.subr.bf16.mxu0 0
      %310 = vmatpush1.bf16.msra.mxu0 0
      %311 = vmatprep.subr.bf16.mxu0 0
      %312 = vmatpush1.bf16.msra.mxu0 0
      %313 = vmatprep.subr.bf16.mxu0 0
      %314 = vmatpush1.bf16.msra.mxu0 0
      %315 = vmatprep.mubr.bf16.mxu0 0
      %316 = vmatmul.mubr.bf16.gmra.mrb[0].mxu0 %v281
      %v317 = vpop.f32.mrb[0].mxu0
      %v318 = vadd.f32 %v253, %v317
      %v319 = vpop.f32.mrb[0].mxu0
      %v320 = vpop.f32.mrb[0].mxu0
      %v321 = vadd.f32 %v253, %v320
      %v322 = vpop.f32.mrb[0].mxu0
      %323 = vdwg.mxu0
      %v324 = vmax.f32 %v318, 0.0
      %v325 = vmax.f32 %v321, 0.0
      %v326 = vpack.c.bf16 %v325, %v324
      %v328 = vunpack.c.l.b16 %v326
      %v329 = vunpack.c.h.b16 %v326
      %v330 = vpack.c.b16 %v328, %v328
      %v331 = vpack.c.b16 %v329, %v329
      %vm334 = vcmask 257024
      %335 = vst.msk [vmem:[#allocation14] sm:$0xf] %vm334, %v330
      %336 = vst.msk [vmem:[#allocation14 + $0x4] sm:$0xf] %vm334, %v331
    $region57: #{tpu_custom_call.1} parent=1 // pred_fallthru
      _
    // Predicated region
    $region58: #{tpu_custom_call.1} parent=1 // pred_check
      _
    $region59: #{tpu_custom_call.1} parent=1 // pred_check_branch
      %338 = sbr.rel (0) target = $region61
    $region60: #{tpu_custom_call.1} parent=1 // pred_region
      %s340 = ssub.s32 128, 128
      %341 = vsyncadd [#allocation5], %s340
      %s342 = sshll.u32 [#allocation14], 4
      %s343 = int_to_ptr.vmem [resolvable:$true] %s342
      %348 = dma.vmem_to_hbm [thread:$0]  %s343, 128, %s6, [#allocation5], 64, 64, 4
    $region61: #{tpu_custom_call.1} parent=1 // pred_fallthru
      _
    // Predicated region
    $region62: #{tpu_custom_call.1} parent=1 // pred_check
      _
    $region63: #{tpu_custom_call.1} parent=1 // pred_check_branch
      %350 = sbr.rel (0) target = $region65
    $region64: #{tpu_custom_call.1} parent=1 // pred_region
      %351 = dma.done [#allocation5], 128
    $region65: #{tpu_custom_call.1} parent=1 // pred_fallthru
      _
    %352 = vsyncpa [#allocation4], 1
    %353 = vsyncpa [#allocation7], 1
    %354 = vsyncpa [#allocation10], 1
    %355 = vsyncpa [#allocation13], 1
    %356 = vsyncpa [#allocation5], 1

</llo_original>
